<compile_context>
chip_gen: v7x
topology: tpu7x:2x2x1
jax: 0.10.0
libtpu: 0.0.40
codegen_flags: <defaults>
</compile_context>

<pallas_src>
import functools

import jax
import jax.numpy as jnp
from jax.experimental import pallas as pl
from jax.experimental.pallas import tpu as pltpu


def _round_up(a: int, b: int) -> int:
    return (a + b - 1) // b * b


def _make_plane_sdf_kernel(D: int):
    def kernel(params_ref, x_ref, o_ref):
        # params_ref (SMEM, f32, shape (D+1,)): [s_0 .. s_{D-1}, bias] with
        #   s    = n / (n·n)
        #   bias = -(v·n) / (n·n)
        # x_ref: (D, TN) lane-dense tile;  o_ref: (1, TN) lane-dense output.
        acc = x_ref[0:1, :].astype(jnp.float32) * params_ref[0]
        for d in range(1, D):                       # unrolled per-coordinate FMA
            acc = acc + x_ref[d:d + 1, :].astype(jnp.float32) * params_ref[d]
        o_ref[...] = (acc + params_ref[D]).astype(o_ref.dtype)

    return kernel


@functools.partial(jax.jit, static_argnames=("tn_max",))
def plane_sdf(x, v, n, *, tn_max=512 * 1024):
    """x: (N, D), v: (D,), n: (D,)  ->  (N, 1), same dtype as x."""
    N, D = x.shape

    # Hoisted plane constants (exact f32 reciprocal, computed once per call,
    # outside the per-tile loop).
    n32 = n.astype(jnp.float32)
    v32 = v.astype(jnp.float32)
    inv_nn = 1.0 / jnp.sum(n32 * n32)
    params = jnp.concatenate(
        [n32 * inv_nn, (-jnp.sum(v32 * n32) * inv_nn)[None]]
    ).astype(jnp.float32)                            # (D + 1,)

    # Lane-dense tiling: N on the lane axis, tile = tn points (multiple of 128).
    tn = int(min(tn_max, _round_up(N, 128)))
    n_pad = _round_up(N, tn)

    # SoA layout (D, N).
    # TODO(synk): if the producer can emit x in SoA (D, N) layout upstream this
    # transpose (one extra read+write pass over x in HBM) disappears entirely.
    xt = jnp.transpose(x)
    if n_pad != N:
        xt = jnp.pad(xt, ((0, 0), (0, n_pad - N)))

    out = pl.pallas_call(
        _make_plane_sdf_kernel(D),
        out_shape=jax.ShapeDtypeStruct((1, n_pad), x.dtype),
        grid_spec=pltpu.PrefetchScalarGridSpec(
            num_scalar_prefetch=0,
            grid=(n_pad // tn,),
            in_specs=[
                pl.BlockSpec(memory_space=pltpu.MemorySpace.SMEM),  # params
                pl.BlockSpec((D, tn), lambda i: (0, i)),            # x tile
            ],
            out_specs=pl.BlockSpec((1, tn), lambda i: (0, i)),      # lane-dense
        ),
        compiler_params=pltpu.CompilerParams(
            dimension_semantics=("parallel",),        # megacore-shardable grid
            vmem_limit_bytes=32 * 1024 * 1024,        # safe on v5e/v6e/v7x
        ),
    )(params, xt)

    return out[0, :N][:, None]


if __name__ == "__main__":
    key = jax.random.PRNGKey(0)
    k_x, k_v, k_n, k_x2 = jax.random.split(key, 4)

    D = 3
    v = jax.random.normal(k_v, (D,), dtype=jnp.float32)
    n = jax.random.normal(k_n, (D,), dtype=jnp.float32)

    def reference(x):
        num = jnp.sum((x - v[None, :]) * n[None, :], axis=-1, keepdims=True)
        return num / jnp.dot(n, n)

    # Lane-aligned size.
    x1 = jax.random.normal(k_x, (256, D), dtype=jnp.float32)
    out1 = jax.block_until_ready(plane_sdf(x1, v, n))
    assert out1.shape == (256, 1)
    assert jnp.allclose(out1, reference(x1), atol=1e-5, rtol=1e-4)

    # Ragged size (exercises the padded-tail path).
    x2 = jax.random.normal(k_x2, (1000, D), dtype=jnp.float32)
    out2 = jax.block_until_ready(plane_sdf(x2, v, n))
    assert out2.shape == (1000, 1)
    assert jnp.allclose(out2, reference(x2), atol=1e-5, rtol=1e-4)

    print("KERNEL_OK")
</pallas_src>

<mosaic_0001>
module attributes {stable_mosaic.version = 11 : i64} {
  func.func @kernel(%arg0: i32, %arg1: memref<4xf32, #tpu.memory_space<smem>>, %arg2: memref<3x256xf32, #tpu.memory_space<vmem>>, %arg3: memref<1x256xf32, #tpu.memory_space<vmem>>) attributes {dimension_semantics = [#tpu.dimension_semantics<parallel>], iteration_bounds = array<i64: 1>, scalar_prefetch = 0 : i64, scratch_operands = 0 : i64, tpu.core_type = #tpu.core_type<tc>, window_params = [{transform_indices = @transform_0, window_bounds = array<i64: 4>}, {transform_indices = @transform_1, window_bounds = array<i64: 3, 256>}, {transform_indices = @transform_2, window_bounds = array<i64: 1, 256>}]} {
    %c0 = arith.constant 0 : index
    %c0_0 = arith.constant 0 : index
    %0 = vector.load %arg2[%c0, %c0_0] : memref<3x256xf32, #tpu.memory_space<vmem>>, vector<1x256xf32>
    %c0_1 = arith.constant 0 : index
    %1 = memref.load %arg1[%c0_1] : memref<4xf32, #tpu.memory_space<smem>>
    %2 = vector.broadcast %1 : f32 to vector<1x256xf32>
    %3 = arith.mulf %0, %2 : vector<1x256xf32>
    %c1 = arith.constant 1 : index
    %c0_2 = arith.constant 0 : index
    %4 = vector.load %arg2[%c1, %c0_2] : memref<3x256xf32, #tpu.memory_space<vmem>>, vector<1x256xf32>
    %c1_3 = arith.constant 1 : index
    %5 = memref.load %arg1[%c1_3] : memref<4xf32, #tpu.memory_space<smem>>
    %6 = vector.broadcast %5 : f32 to vector<1x256xf32>
    %7 = arith.mulf %4, %6 : vector<1x256xf32>
    %8 = arith.addf %3, %7 : vector<1x256xf32>
    %c2 = arith.constant 2 : index
    %c0_4 = arith.constant 0 : index
    %9 = vector.load %arg2[%c2, %c0_4] : memref<3x256xf32, #tpu.memory_space<vmem>>, vector<1x256xf32>
    %c2_5 = arith.constant 2 : index
    %10 = memref.load %arg1[%c2_5] : memref<4xf32, #tpu.memory_space<smem>>
    %11 = vector.broadcast %10 : f32 to vector<1x256xf32>
    %12 = arith.mulf %9, %11 : vector<1x256xf32>
    %13 = arith.addf %8, %12 : vector<1x256xf32>
    %c3 = arith.constant 3 : index
    %14 = memref.load %arg1[%c3] : memref<4xf32, #tpu.memory_space<smem>>
    %15 = vector.broadcast %14 : f32 to vector<1x256xf32>
    %16 = arith.addf %13, %15 : vector<1x256xf32>
    %c0_6 = arith.constant 0 : index
    %c0_7 = arith.constant 0 : index
    %17 = vector.load %arg3[%c0_6, %c0_7] : memref<1x256xf32, #tpu.memory_space<vmem>>, vector<1x256xf32>
    tpu.vector_store %arg3[%c0_6, %c0_7], %16 {strides = array<i32>} : memref<1x256xf32, #tpu.memory_space<vmem>>, vector<1x256xf32>,
    return
  }
  func.func @transform_0(%arg0: i32) -> i32 {
    %c0_i32 = arith.constant 0 : i32
    %c0_i32_0 = arith.constant 0 : i32
    return %c0_i32 : i32
  }
  func.func @transform_1(%arg0: i32) -> (i32, i32) {
    %c0_i32 = arith.constant 0 : i32
    %c0_i32_0 = arith.constant 0 : i32
    return %c0_i32, %arg0 : i32, i32
  }
  func.func @transform_2(%arg0: i32) -> (i32, i32) {
    %c0_i32 = arith.constant 0 : i32
    %c0_i32_0 = arith.constant 0 : i32
    return %c0_i32, %arg0 : i32, i32
  }
}

</mosaic_0001>

<llo_original>
// kernel: plane_sdf.1
$region0: #{plane_sdf.1}
  #allocation0 [shape = 'u32[]', space=smem, size = 0x4, offset = 0x4, fixed_abs, tag = 'smem constant byte address 0x4 - core index']
  #allocation1 [shape = 'u32[144,128]{1,0:T(1,128)}', space=vmem, size = 0x12000, scoped, tag = 'internal scratch']
  %s0 = inlined_call_operand.vmem [shape: f32[4], index: 0, kind: input, shape index: {}]
  %s1 = inlined_call_operand.vmem [shape: f32[3,256], index: 1, kind: input, shape index: {}]
  %s2 = inlined_call_operand.hbm [shape: f32[1,256], index: 2, kind: output, shape index: {}]
  %s3 = sld [smem:[#allocation0]]
  $region22: #{plane_sdf.1} parent=0
    _
  %s5 = ssub.s32 1, %s3
  %s6 = scalar_select 0, %s5, %s3
  $region1: #{plane_sdf.1} parent=0
    #allocation2 [shape = 'u8[512]{0}', space=smem, size = 0x200, scoped, tag = 'input window, operand 0, single buffered']
    #allocation3 [shape = 's32[1]{0}', space=sflag, size = 0x4, scoped, tag = 'scoped memory for plane_sdf.1']
    #allocation4 [shape = 's32[1]{0}', space=sflag, size = 0x4, scoped, tag = 'scoped memory for plane_sdf.1']
    #allocation5 [shape = 'u8[1024]{0}', space=vmem, size = 0x400, scoped, tag = 'output window, operand 0, single buffered']
    %7 = vsyncpa [#allocation4], 0
    %8 = vsyncpa [#allocation3], 0
    // Predicated region
    $region2: #{plane_sdf.1} parent=1 // pred_check
      _
    $region3: #{plane_sdf.1} parent=1 // pred_check_branch
      %10 = sbr.rel (0) target = $region5
    $region4: #{plane_sdf.1} parent=1 // pred_region
      %s12 = ssub.s32 16, 16
      %13 = vsyncadd [#allocation4], %s12
      %s15 = sshll.u32 %s0, 4
      %s16 = int_to_ptr.vmem [resolvable:$true] %s15
      %18 = dma.vmem_to_smem %s16, 16, [#allocation2], [#allocation4]
    $region5: #{plane_sdf.1} parent=1 // pred_fallthru
      _
    // Predicated region
    $region6: #{plane_sdf.1} parent=1 // pred_check
      _
    $region7: #{plane_sdf.1} parent=1 // pred_check_branch
      %20 = sbr.rel (0) target = $region9
    $region8: #{plane_sdf.1} parent=1 // pred_region
      _
    $region9: #{plane_sdf.1} parent=1 // pred_fallthru
      _
    // Predicated region
    $region10: #{plane_sdf.1} parent=1 // pred_check
      _
    $region11: #{plane_sdf.1} parent=1 // pred_check_branch
      %22 = sbr.rel (0) target = $region13
    $region12: #{plane_sdf.1} parent=1 // pred_region
      %23 = dma.done [#allocation4], 16
    $region13: #{plane_sdf.1} parent=1 // pred_fallthru
      _
    %24 = sfence
    %v25 = vld [vmem:[%s1] ss:$4 sm:$0x3]
    %s26 = sld [smem:[#allocation2]]
    %v27 = vstv %s26
    %v28 = vmul.f32 %v25, %v27
    %s29 = scalar_lea.vmem %s1, 1
    %v30 = vld [vmem:[%s29] ss:$4 sm:$0x3]
    %s31 = sld [smem:[#allocation2 + $0x1]]
    %v32 = vstv %s31
    %v33 = vmul.f32 %v30, %v32
    %v34 = vadd.f32 %v28, %v33
    %s35 = scalar_lea.vmem %s1, 2
    %v36 = vld [vmem:[%s35] ss:$4 sm:$0x3]
    %s37 = sld [smem:[#allocation2 + $0x2]]
    %v38 = vstv %s37
    %v39 = vmul.f32 %v36, %v38
    %v40 = vadd.f32 %v34, %v39
    %s41 = sld [smem:[#allocation2 + $0x3]]
    %v42 = vstv %s41
    %v43 = vadd.f32 %v40, %v42
    %v44 = vlaneseq
    %vm45 = vcmp.ge.s32.totalorder %v44, 0
    %vm46 = vcmp.lt.s32.totalorder %v44, 256
    %vm47 = vmand %vm45, %vm46
    %48 = vst.msk [vmem:[#allocation5] sm:$0x3] %vm47, %v43
    // Predicated region
    $region14: #{plane_sdf.1} parent=1 // pred_check
      _
    $region15: #{plane_sdf.1} parent=1 // pred_check_branch
      %50 = sbr.rel (0) target = $region17
    $region16: #{plane_sdf.1} parent=1 // pred_region
      %s52 = ssub.s32 32, 32
      %53 = vsyncadd [#allocation3], %s52
      %s55 = sshll.u32 [#allocation5], 4
      %s56 = int_to_ptr.vmem [resolvable:$true] %s55
      %58 = dma.vmem_to_hbm [thread:$0]  %s56, 32, %s2, [#allocation3]
    $region17: #{plane_sdf.1} parent=1 // pred_fallthru
      _
    // Predicated region
    $region18: #{plane_sdf.1} parent=1 // pred_check
      _
    $region19: #{plane_sdf.1} parent=1 // pred_check_branch
      %60 = sbr.rel (0) target = $region21
    $region20: #{plane_sdf.1} parent=1 // pred_region
      %61 = dma.done [#allocation3], 32
    $region21: #{plane_sdf.1} parent=1 // pred_fallthru
      _
    %62 = vsyncpa [#allocation3], 1
    %63 = vsyncpa [#allocation4], 1

</llo_original>
